<compile_context>
chip_gen: v7x
topology: tpu7x:2x2x1
jax: 0.10.0
libtpu: 0.0.40
codegen_flags: <defaults>
</compile_context>

<pallas_src>
import jax
import jax.numpy as jnp
from jax.experimental import pallas as pl
from jax.experimental.pallas import tpu as pltpu


# ----------------------------- Pallas kernel --------------------------------

def _make_decoder_kernel(T, T_pad, n_layers, hidden):
    """Builds a single-invocation kernel that runs all T decode steps in-body."""
    del T_pad  # implicit in the ref shapes

    def kernel(emb_ref,    # VMEM (T_pad, E) bf16   -- pre-gathered embedding rows
               h0_ref,     # VMEM (L, 1, H) f32     -- initial hidden
               w_ref,      # VMEM (L, E+H, 4H) bf16 -- fused/packed GRU weights
               b_ref,      # VMEM (L, 1, 4H) f32    -- fused GRU biases
               wout_ref,   # VMEM (H, V) bf16       -- output projection (transposed)
               bout_ref,   # VMEM (1, V) f32
               logp_ref,   # out  (T_pad, V) f32    -- dense log-prob slab
               hout_ref,   # out  (L, 1, H) f32     -- final hidden
               xbuf_ref):  # scratch VMEM (T_pad, H) f32 -- final-layer output per step
        H = hidden
        L = n_layers

        # Zero the staging buffer so padded rows produce finite (and discarded) logits.
        xbuf_ref[...] = jnp.zeros_like(xbuf_ref)

        # Hidden state carried in registers across the (static, unrolled) time loop.
        hs = [h0_ref[l] for l in range(L)]               # each (1, H) f32

        for t in range(T):
            x = emb_ref[pl.ds(t, 1), :]                  # (1, E) bf16
            for l in range(L):
                # Fused GRU: one (1, E+H) @ (E+H, 4H) MXU matmul per layer.
                xh = jnp.concatenate([x, hs[l].astype(jnp.bfloat16)], axis=1)   # (1, E+H)
                g = jnp.dot(xh, w_ref[l],
                            preferred_element_type=jnp.float32) + b_ref[l]      # (1, 4H) f32
                # lane-aligned gate slices (H is a multiple of 128)
                r = jax.nn.sigmoid(g[:, 0:H])
                z = jax.nn.sigmoid(g[:, H:2 * H])
                n = jnp.tanh(g[:, 2 * H:3 * H] + r * g[:, 3 * H:4 * H])
                h_new = (1.0 - z) * n + z * hs[l]        # (1, H) f32
                hs[l] = h_new
                x = h_new.astype(jnp.bfloat16)           # feeds next layer
            # Stash this step's final-layer output for the batched projection.
            xbuf_ref[pl.ds(t, 1), :] = hs[L - 1]

        # Batched output projection + log_softmax over all T steps, one dense store.
        X = xbuf_ref[...].astype(jnp.bfloat16)           # (T_pad, H)
        logits = jnp.dot(X, wout_ref[...],
                         preferred_element_type=jnp.float32) + bout_ref[...]    # (T_pad, V)
        m = jnp.max(logits, axis=1, keepdims=True)
        s = logits - m
        lse = jnp.log(jnp.sum(jnp.exp(s), axis=1, keepdims=True))
        logp_ref[...] = s - lse

        for l in range(L):
            hout_ref[l] = hs[l]

    return kernel


# ------------------------------ Wrapper --------------------------------------

@jax.jit
def decoder_forward(input_words, last_hidden, params):
    """input_words: int32 (T,); last_hidden: (L, 1, H) f32.

    Returns (log-probs (T, V) f32, final hidden (L, 1, H) f32).
    T == 1 is exactly the PyTorch module's single-step forward.
    """
    emb, w_packed, b_packed, wout_t, bout = params
    L, _, H = last_hidden.shape
    V, E = emb.shape
    T = input_words.shape[0]
    T_pad = ((T + 7) // 8) * 8                           # sublane-dense output rows

    # Clamp token ids (PyTorch embedding would raise on OOB ids; we clamp for safety).
    tokens = jnp.clip(input_words.astype(jnp.int32), 0, V - 1)
    tokens = jnp.pad(tokens, (0, T_pad - T))
    emb_rows = jnp.take(emb, tokens, axis=0)             # (T_pad, E) bf16 gather in XLA

    kernel = _make_decoder_kernel(T, T_pad, L, H)

    logp_pad, hidden = pl.pallas_call(
        kernel,
        grid=(1,),
        in_specs=[
            pl.BlockSpec((T_pad, E), lambda i: (0, 0)),
            pl.BlockSpec((L, 1, H), lambda i: (0, 0, 0)),
            pl.BlockSpec((L, E + H, 4 * H), lambda i: (0, 0, 0)),
            pl.BlockSpec((L, 1, 4 * H), lambda i: (0, 0, 0)),
            pl.BlockSpec((H, V), lambda i: (0, 0)),
            pl.BlockSpec((1, V), lambda i: (0, 0)),
        ],
        out_specs=(
            pl.BlockSpec((T_pad, V), lambda i: (0, 0)),
            pl.BlockSpec((L, 1, H), lambda i: (0, 0, 0)),
        ),
        out_shape=(
            jax.ShapeDtypeStruct((T_pad, V), jnp.float32),
            jax.ShapeDtypeStruct((L, 1, H), jnp.float32),
        ),
        scratch_shapes=[pltpu.VMEM((T_pad, H), jnp.float32)],
        compiler_params=pltpu.CompilerParams(
            dimension_semantics=("arbitrary",)),
    )(emb_rows, last_hidden, w_packed, b_packed, wout_t, bout)

    return logp_pad[:T], hidden


# --------------------------- Parameter packing --------------------------------

def pack_decoder_params(embedding, wih, whh, bih, bhh, wout, bout):
    """Pack PyTorch-layout GRU/Linear params into the fused kernel layout.

    embedding: (V, E) f32
    wih: (L, 3H, E), whh: (L, 3H, H), bih/bhh: (L, 3H)   -- gate order [r, z, n]
    wout: (V, H), bout: (V,)
    """
    L, threeH, E = wih.shape
    H = threeH // 3
    wih_t = jnp.transpose(wih.astype(jnp.bfloat16), (0, 2, 1))      # (L, E, 3H)
    whh_t = jnp.transpose(whh.astype(jnp.bfloat16), (0, 2, 1))      # (L, H, 3H)
    # fused columns: [ r | z | n_from_x | n_from_h ]
    top = jnp.concatenate([wih_t[:, :, :2 * H],
                           wih_t[:, :, 2 * H:],
                           jnp.zeros((L, E, H), jnp.bfloat16)], axis=2)        # (L, E, 4H)
    bot = jnp.concatenate([whh_t[:, :, :2 * H],
                           jnp.zeros((L, H, H), jnp.bfloat16),
                           whh_t[:, :, 2 * H:]], axis=2)                       # (L, H, 4H)
    w_packed = jnp.concatenate([top, bot], axis=1)                             # (L, E+H, 4H)
    b_packed = jnp.concatenate([bih[:, :2 * H] + bhh[:, :2 * H],
                                bih[:, 2 * H:],
                                bhh[:, 2 * H:]],
                               axis=1)[:, None, :].astype(jnp.float32)         # (L, 1, 4H)
    wout_t = jnp.transpose(wout, (1, 0)).astype(jnp.bfloat16)                  # (H, V)
    bout2 = bout[None, :].astype(jnp.float32)                                  # (1, V)
    return (embedding.astype(jnp.bfloat16), w_packed, b_packed, wout_t, bout2)


# ---------------------------- Pure-JAX reference ------------------------------

def decoder_reference(input_words, last_hidden, embedding, wih, whh, bih, bhh, wout, bout):
    """Step-by-step GRU decoder in the unfused PyTorch formulation (bf16 weights,
    f32 accumulation / state) — validates both the kernel and the weight packing."""
    L, _, H = last_hidden.shape
    emb_b = embedding.astype(jnp.bfloat16)
    wih_b = wih.astype(jnp.bfloat16)
    whh_b = whh.astype(jnp.bfloat16)
    wout_b = wout.astype(jnp.bfloat16)
    h = last_hidden
    logps = []
    for t in range(input_words.shape[0]):
        x = emb_b[input_words[t]][None, :]                           # (1, E) bf16
        new_h = []
        for l in range(L):
            hl = h[l]
            gi = jnp.dot(x, wih_b[l].T,
                         preferred_element_type=jnp.float32) + bih[l][None, :]
            gh = jnp.dot(hl.astype(jnp.bfloat16), whh_b[l].T,
                         preferred_element_type=jnp.float32) + bhh[l][None, :]
            r = jax.nn.sigmoid(gi[:, :H] + gh[:, :H])
            z = jax.nn.sigmoid(gi[:, H:2 * H] + gh[:, H:2 * H])
            n = jnp.tanh(gi[:, 2 * H:] + r * gh[:, 2 * H:])
            h_new = (1.0 - z) * n + z * hl
            new_h.append(h_new)
            x = h_new.astype(jnp.bfloat16)
        h = jnp.stack(new_h, axis=0)
        logits = jnp.dot(x, wout_b.T,
                         preferred_element_type=jnp.float32) + bout[None, :]
        logps.append(jax.nn.log_softmax(logits, axis=1)[0])
    return jnp.stack(logps, axis=0), h


# --------------------------------- Main ---------------------------------------

if __name__ == "__main__":
    # config (synthetic, deterministic): GRU decoder, embedding_size == hidden_size,
    # H / V multiples of 128 so gate slices and all stores are lane-aligned / dense.
    VOCAB = 256
    HIDDEN = 128
    EMBED = HIDDEN
    LAYERS = 2

    key = jax.random.PRNGKey(0)
    ks = jax.random.split(key, 8)
    scale = 0.1

    # PyTorch-layout f32 parameters (then packed/quantized for the kernel).
    embedding = scale * jax.random.normal(ks[0], (VOCAB, EMBED), jnp.float32)
    wih = scale * jax.random.normal(ks[1], (LAYERS, 3 * HIDDEN, EMBED), jnp.float32)
    whh = scale * jax.random.normal(ks[2], (LAYERS, 3 * HIDDEN, HIDDEN), jnp.float32)
    bih = scale * jax.random.normal(ks[3], (LAYERS, 3 * HIDDEN), jnp.float32)
    bhh = scale * jax.random.normal(ks[4], (LAYERS, 3 * HIDDEN), jnp.float32)
    wout = scale * jax.random.normal(ks[5], (VOCAB, HIDDEN), jnp.float32)
    bout = scale * jax.random.normal(ks[6], (VOCAB,), jnp.float32)
    last_hidden = scale * jax.random.normal(ks[7], (LAYERS, 1, HIDDEN), jnp.float32)

    params = pack_decoder_params(embedding, wih, whh, bih, bhh, wout, bout)

    # ---- single-step call: exactly the module's forward(input_word, last_hidden) ----
    input_word = jnp.array([7], dtype=jnp.int32)
    logp1, hid1 = decoder_forward(input_word, last_hidden, params)
    logp1 = jax.block_until_ready(logp1)
    hid1 = jax.block_until_ready(hid1)
    ref_logp1, ref_hid1 = decoder_reference(input_word, last_hidden,
                                            embedding, wih, whh, bih, bhh, wout, bout)
    assert logp1.shape == (1, VOCAB) and hid1.shape == (LAYERS, 1, HIDDEN)
    assert jnp.allclose(logp1, ref_logp1, atol=1e-3, rtol=1e-3)
    assert jnp.allclose(hid1, ref_hid1, atol=1e-3, rtol=1e-3)

    # ---- multi-token teacher-forced decode: all T steps inside one kernel call ----
    input_words = jnp.array([7, 3, 200, 42], dtype=jnp.int32)
    T = input_words.shape[0]
    logpT, hidT = decoder_forward(input_words, last_hidden, params)
    logpT = jax.block_until_ready(logpT)
    hidT = jax.block_until_ready(hidT)
    ref_logpT, ref_hidT = decoder_reference(input_words, last_hidden,
                                            embedding, wih, whh, bih, bhh, wout, bout)
    assert logpT.shape == (T, VOCAB) and hidT.shape == (LAYERS, 1, HIDDEN)
    assert jnp.allclose(logpT, ref_logpT, atol=1e-3, rtol=1e-3)
    assert jnp.allclose(hidT, ref_hidT, atol=1e-3, rtol=1e-3)

    print("KERNEL_OK")
</pallas_src>

<mosaic_0001>
module attributes {stable_mosaic.version = 11 : i64} {
  func.func @kernel(%arg0: i32, %arg1: memref<8x128xbf16, #tpu.memory_space<vmem>>, %arg2: memref<2x1x128xf32, #tpu.memory_space<vmem>>, %arg3: memref<2x256x512xbf16, #tpu.memory_space<vmem>>, %arg4: memref<2x1x512xf32, #tpu.memory_space<vmem>>, %arg5: memref<128x256xbf16, #tpu.memory_space<vmem>>, %arg6: memref<1x256xf32, #tpu.memory_space<vmem>>, %arg7: memref<8x256xf32, #tpu.memory_space<vmem>>, %arg8: memref<2x1x128xf32, #tpu.memory_space<vmem>>, %arg9: memref<8x128xf32, #tpu.memory_space<vmem>>) attributes {dimension_semantics = [#tpu.dimension_semantics<arbitrary>], iteration_bounds = array<i64: 1>, scalar_prefetch = 0 : i64, scratch_operands = 1 : i64, tpu.core_type = #tpu.core_type<tc>, window_params = [{pipeline_mode = #tpu.pipeline_mode<synchronous>, transform_indices = @transform_0, window_bounds = array<i64: 8, 128>}, {pipeline_mode = #tpu.pipeline_mode<synchronous>, transform_indices = @transform_1, window_bounds = array<i64: 2, 1, 128>}, {pipeline_mode = #tpu.pipeline_mode<synchronous>, transform_indices = @transform_2, window_bounds = array<i64: 2, 256, 512>}, {pipeline_mode = #tpu.pipeline_mode<synchronous>, transform_indices = @transform_3, window_bounds = array<i64: 2, 1, 512>}, {pipeline_mode = #tpu.pipeline_mode<synchronous>, transform_indices = @transform_4, window_bounds = array<i64: 128, 256>}, {pipeline_mode = #tpu.pipeline_mode<synchronous>, transform_indices = @transform_5, window_bounds = array<i64: 1, 256>}, {pipeline_mode = #tpu.pipeline_mode<synchronous>, transform_indices = @transform_6, window_bounds = array<i64: 8, 256>}, {pipeline_mode = #tpu.pipeline_mode<synchronous>, transform_indices = @transform_7, window_bounds = array<i64: 2, 1, 128>}]} {
    %cst = arith.constant 0.000000e+00 : f32
    %0 = vector.broadcast %cst : f32 to vector<8x128xf32>
    %c0 = arith.constant 0 : index
    %c0_0 = arith.constant 0 : index
    %1 = vector.load %arg9[%c0, %c0_0] : memref<8x128xf32, #tpu.memory_space<vmem>>, vector<8x128xf32>
    tpu.vector_store %arg9[%c0, %c0_0], %0 {strides = array<i32>} : memref<8x128xf32, #tpu.memory_space<vmem>>, vector<8x128xf32>,
    %c0_1 = arith.constant 0 : index
    %c0_2 = arith.constant 0 : index
    %c0_3 = arith.constant 0 : index
    %2 = vector.load %arg2[%c0_1, %c0_2, %c0_3] : memref<2x1x128xf32, #tpu.memory_space<vmem>>, vector<1x1x128xf32>
    %3 = vector.shape_cast %2 : vector<1x1x128xf32> to vector<1x128xf32>
    %c1 = arith.constant 1 : index
    %c0_4 = arith.constant 0 : index
    %c0_5 = arith.constant 0 : index
    %4 = vector.load %arg2[%c1, %c0_4, %c0_5] : memref<2x1x128xf32, #tpu.memory_space<vmem>>, vector<1x1x128xf32>
    %5 = vector.shape_cast %4 : vector<1x1x128xf32> to vector<1x128xf32>
    %c0_6 = arith.constant 0 : index
    %c0_7 = arith.constant 0 : index
    %6 = vector.load %arg1[%c0_6, %c0_7] : memref<8x128xbf16, #tpu.memory_space<vmem>>, vector<1x128xbf16>
    %7 = arith.truncf %3 : vector<1x128xf32> to vector<1x128xbf16>
    %8 = tpu.concatenate %6, %7 in 1 : vector<1x128xbf16>, vector<1x128xbf16> -> vector<1x256xbf16>
    %c0_8 = arith.constant 0 : index
    %c0_9 = arith.constant 0 : index
    %c0_10 = arith.constant 0 : index
    %9 = vector.load %arg3[%c0_8, %c0_9, %c0_10] : memref<2x256x512xbf16, #tpu.memory_space<vmem>>, vector<1x256x512xbf16>
    %10 = vector.shape_cast %9 : vector<1x256x512xbf16> to vector<256x512xbf16>
    %cst_11 = arith.constant dense<0.000000e+00> : vector<1x512xf32>
    %11 = tpu.matmul %8, %10, %cst_11 {dimension_numbers = #tpu.dot_dimension_numbers<[1], [0], [0], [1], [0, 0, 1, 1], [], []>} : vector<1x256xbf16>, vector<256x512xbf16>, vector<1x512xf32> -> vector<1x512xf32>
    %c0_12 = arith.constant 0 : index
    %c0_13 = arith.constant 0 : index
    %c0_14 = arith.constant 0 : index
    %12 = vector.load %arg4[%c0_12, %c0_13, %c0_14] : memref<2x1x512xf32, #tpu.memory_space<vmem>>, vector<1x1x512xf32>
    %13 = vector.shape_cast %12 : vector<1x1x512xf32> to vector<1x512xf32>
    %14 = arith.addf %11, %13 : vector<1x512xf32>
    %15 = vector.extract_strided_slice %14 {offsets = [0, 0], sizes = [1, 128], strides = [1, 1]} : vector<1x512xf32> to vector<1x128xf32>
    %16 = arith.negf %15 : vector<1x128xf32>
    %17 = math.exp %16 : vector<1x128xf32>
    %cst_15 = arith.constant 1.000000e+00 : f32
    %18 = vector.broadcast %cst_15 : f32 to vector<1x128xf32>
    %19 = arith.addf %18, %17 : vector<1x128xf32>
    %20 = arith.divf %18, %19 : vector<1x128xf32>
    %21 = vector.extract_strided_slice %14 {offsets = [0, 128], sizes = [1, 128], strides = [1, 1]} : vector<1x512xf32> to vector<1x128xf32>
    %22 = arith.negf %21 : vector<1x128xf32>
    %23 = math.exp %22 : vector<1x128xf32>
    %cst_16 = arith.constant 1.000000e+00 : f32
    %24 = vector.broadcast %cst_16 : f32 to vector<1x128xf32>
    %25 = arith.addf %24, %23 : vector<1x128xf32>
    %26 = arith.divf %24, %25 : vector<1x128xf32>
    %27 = vector.extract_strided_slice %14 {offsets = [0, 256], sizes = [1, 128], strides = [1, 1]} : vector<1x512xf32> to vector<1x128xf32>
    %28 = vector.extract_strided_slice %14 {offsets = [0, 384], sizes = [1, 128], strides = [1, 1]} : vector<1x512xf32> to vector<1x128xf32>
    %29 = arith.mulf %20, %28 : vector<1x128xf32>
    %30 = arith.addf %27, %29 : vector<1x128xf32>
    %31 = math.tanh %30 : vector<1x128xf32>
    %cst_17 = arith.constant 1.000000e+00 : f32
    %32 = vector.broadcast %cst_17 : f32 to vector<1x128xf32>
    %33 = arith.subf %32, %26 : vector<1x128xf32>
    %34 = arith.mulf %33, %31 : vector<1x128xf32>
    %35 = arith.mulf %26, %3 : vector<1x128xf32>
    %36 = arith.addf %34, %35 : vector<1x128xf32>
    %37 = arith.truncf %36 : vector<1x128xf32> to vector<1x128xbf16>
    %38 = arith.truncf %5 : vector<1x128xf32> to vector<1x128xbf16>
    %39 = tpu.concatenate %37, %38 in 1 : vector<1x128xbf16>, vector<1x128xbf16> -> vector<1x256xbf16>
    %c1_18 = arith.constant 1 : index
    %c0_19 = arith.constant 0 : index
    %c0_20 = arith.constant 0 : index
    %40 = vector.load %arg3[%c1_18, %c0_19, %c0_20] : memref<2x256x512xbf16, #tpu.memory_space<vmem>>, vector<1x256x512xbf16>
    %41 = vector.shape_cast %40 : vector<1x256x512xbf16> to vector<256x512xbf16>
    %cst_21 = arith.constant dense<0.000000e+00> : vector<1x512xf32>
    %42 = tpu.matmul %39, %41, %cst_21 {dimension_numbers = #tpu.dot_dimension_numbers<[1], [0], [0], [1], [0, 0, 1, 1], [], []>} : vector<1x256xbf16>, vector<256x512xbf16>, vector<1x512xf32> -> vector<1x512xf32>
    %c1_22 = arith.constant 1 : index
    %c0_23 = arith.constant 0 : index
    %c0_24 = arith.constant 0 : index
    %43 = vector.load %arg4[%c1_22, %c0_23, %c0_24] : memref<2x1x512xf32, #tpu.memory_space<vmem>>, vector<1x1x512xf32>
    %44 = vector.shape_cast %43 : vector<1x1x512xf32> to vector<1x512xf32>
    %45 = arith.addf %42, %44 : vector<1x512xf32>
    %46 = vector.extract_strided_slice %45 {offsets = [0, 0], sizes = [1, 128], strides = [1, 1]} : vector<1x512xf32> to vector<1x128xf32>
    %47 = arith.negf %46 : vector<1x128xf32>
    %48 = math.exp %47 : vector<1x128xf32>
    %cst_25 = arith.constant 1.000000e+00 : f32
    %49 = vector.broadcast %cst_25 : f32 to vector<1x128xf32>
    %50 = arith.addf %49, %48 : vector<1x128xf32>
    %51 = arith.divf %49, %50 : vector<1x128xf32>
    %52 = vector.extract_strided_slice %45 {offsets = [0, 128], sizes = [1, 128], strides = [1, 1]} : vector<1x512xf32> to vector<1x128xf32>
    %53 = arith.negf %52 : vector<1x128xf32>
    %54 = math.exp %53 : vector<1x128xf32>
    %cst_26 = arith.constant 1.000000e+00 : f32
    %55 = vector.broadcast %cst_26 : f32 to vector<1x128xf32>
    %56 = arith.addf %55, %54 : vector<1x128xf32>
    %57 = arith.divf %55, %56 : vector<1x128xf32>
    %58 = vector.extract_strided_slice %45 {offsets = [0, 256], sizes = [1, 128], strides = [1, 1]} : vector<1x512xf32> to vector<1x128xf32>
    %59 = vector.extract_strided_slice %45 {offsets = [0, 384], sizes = [1, 128], strides = [1, 1]} : vector<1x512xf32> to vector<1x128xf32>
    %60 = arith.mulf %51, %59 : vector<1x128xf32>
    %61 = arith.addf %58, %60 : vector<1x128xf32>
    %62 = math.tanh %61 : vector<1x128xf32>
    %cst_27 = arith.constant 1.000000e+00 : f32
    %63 = vector.broadcast %cst_27 : f32 to vector<1x128xf32>
    %64 = arith.subf %63, %57 : vector<1x128xf32>
    %65 = arith.mulf %64, %62 : vector<1x128xf32>
    %66 = arith.mulf %57, %5 : vector<1x128xf32>
    %67 = arith.addf %65, %66 : vector<1x128xf32>
    %c0_28 = arith.constant 0 : index
    %c0_29 = arith.constant 0 : index
    %68 = vector.load %arg9[%c0_28, %c0_29] : memref<8x128xf32, #tpu.memory_space<vmem>>, vector<1x128xf32>
    tpu.vector_store %arg9[%c0_28, %c0_29], %67 {strides = array<i32>} : memref<8x128xf32, #tpu.memory_space<vmem>>, vector<1x128xf32>,
    %c0_30 = arith.constant 0 : index
    %c0_31 = arith.constant 0 : index
    %69 = vector.load %arg9[%c0_30, %c0_31] : memref<8x128xf32, #tpu.memory_space<vmem>>, vector<8x128xf32>
    %70 = arith.truncf %69 : vector<8x128xf32> to vector<8x128xbf16>
    %c0_32 = arith.constant 0 : index
    %c0_33 = arith.constant 0 : index
    %71 = vector.load %arg5[%c0_32, %c0_33] : memref<128x256xbf16, #tpu.memory_space<vmem>>, vector<128x256xbf16>
    %cst_34 = arith.constant dense<0.000000e+00> : vector<8x256xf32>
    %72 = tpu.matmul %70, %71, %cst_34 {dimension_numbers = #tpu.dot_dimension_numbers<[1], [0], [0], [1], [0, 0, 1, 1], [], []>} : vector<8x128xbf16>, vector<128x256xbf16>, vector<8x256xf32> -> vector<8x256xf32>
    %c0_35 = arith.constant 0 : index
    %c0_36 = arith.constant 0 : index
    %73 = vector.load %arg6[%c0_35, %c0_36] : memref<1x256xf32, #tpu.memory_space<vmem>>, vector<1x256xf32>
    %74 = vector.broadcast %73 : vector<1x256xf32> to vector<8x256xf32>
    %75 = arith.addf %72, %74 : vector<8x256xf32>
    %cst_37 = arith.constant dense<0xFF800000> : vector<8xf32>
    %76 = vector.multi_reduction <maximumf>, %75, %cst_37 [1] : vector<8x256xf32> to vector<8xf32>
    %77 = vector.shape_cast %76 : vector<8xf32> to vector<8x1xf32>
    %78 = vector.broadcast %77 : vector<8x1xf32> to vector<8x256xf32>
    %79 = arith.subf %75, %78 : vector<8x256xf32>
    %80 = math.exp %79 : vector<8x256xf32>
    %cst_38 = arith.constant dense<0.000000e+00> : vector<8xf32>
    %81 = vector.multi_reduction <add>, %80, %cst_38 [1] : vector<8x256xf32> to vector<8xf32>
    %82 = vector.shape_cast %81 : vector<8xf32> to vector<8x1xf32>
    %83 = math.log %82 : vector<8x1xf32>
    %84 = vector.broadcast %83 : vector<8x1xf32> to vector<8x256xf32>
    %85 = arith.subf %79, %84 : vector<8x256xf32>
    %c0_39 = arith.constant 0 : index
    %c0_40 = arith.constant 0 : index
    %86 = vector.load %arg7[%c0_39, %c0_40] : memref<8x256xf32, #tpu.memory_space<vmem>>, vector<8x256xf32>
    tpu.vector_store %arg7[%c0_39, %c0_40], %85 {strides = array<i32>} : memref<8x256xf32, #tpu.memory_space<vmem>>, vector<8x256xf32>,
    %c0_41 = arith.constant 0 : index
    %c0_42 = arith.constant 0 : index
    %c0_43 = arith.constant 0 : index
    %87 = vector.load %arg8[%c0_41, %c0_42, %c0_43] : memref<2x1x128xf32, #tpu.memory_space<vmem>>, vector<1x1x128xf32>
    %88 = vector.shape_cast %87 : vector<1x1x128xf32> to vector<1x128xf32>
    %89 = vector.shape_cast %36 : vector<1x128xf32> to vector<1x1x128xf32>
    tpu.vector_store %arg8[%c0_41, %c0_42, %c0_43], %89 {strides = array<i32>} : memref<2x1x128xf32, #tpu.memory_space<vmem>>, vector<1x1x128xf32>,
    %c1_44 = arith.constant 1 : index
    %c0_45 = arith.constant 0 : index
    %c0_46 = arith.constant 0 : index
    %90 = vector.load %arg8[%c1_44, %c0_45, %c0_46] : memref<2x1x128xf32, #tpu.memory_space<vmem>>, vector<1x1x128xf32>
    %91 = vector.shape_cast %90 : vector<1x1x128xf32> to vector<1x128xf32>
    %92 = vector.shape_cast %67 : vector<1x128xf32> to vector<1x1x128xf32>
    tpu.vector_store %arg8[%c1_44, %c0_45, %c0_46], %92 {strides = array<i32>} : memref<2x1x128xf32, #tpu.memory_space<vmem>>, vector<1x1x128xf32>,
    return
  }
  func.func @transform_0(%arg0: i32) -> (i32, i32) {
    %c0_i32 = arith.constant 0 : i32
    %c0_i32_0 = arith.constant 0 : i32
    %c0_i32_1 = arith.constant 0 : i32
    return %c0_i32, %c0_i32_0 : i32, i32
  }
  func.func @transform_1(%arg0: i32) -> (i32, i32, i32) {
    %c0_i32 = arith.constant 0 : i32
    %c0_i32_0 = arith.constant 0 : i32
    %c0_i32_1 = arith.constant 0 : i32
    %c0_i32_2 = arith.constant 0 : i32
    return %c0_i32, %c0_i32_0, %c0_i32_1 : i32, i32, i32
  }
  func.func @transform_2(%arg0: i32) -> (i32, i32, i32) {
    %c0_i32 = arith.constant 0 : i32
    %c0_i32_0 = arith.constant 0 : i32
    %c0_i32_1 = arith.constant 0 : i32
    %c0_i32_2 = arith.constant 0 : i32
    return %c0_i32, %c0_i32_0, %c0_i32_1 : i32, i32, i32
  }
  func.func @transform_3(%arg0: i32) -> (i32, i32, i32) {
    %c0_i32 = arith.constant 0 : i32
    %c0_i32_0 = arith.constant 0 : i32
    %c0_i32_1 = arith.constant 0 : i32
    %c0_i32_2 = arith.constant 0 : i32
    return %c0_i32, %c0_i32_0, %c0_i32_1 : i32, i32, i32
  }
  func.func @transform_4(%arg0: i32) -> (i32, i32) {
    %c0_i32 = arith.constant 0 : i32
    %c0_i32_0 = arith.constant 0 : i32
    %c0_i32_1 = arith.constant 0 : i32
    return %c0_i32, %c0_i32_0 : i32, i32
  }
  func.func @transform_5(%arg0: i32) -> (i32, i32) {
    %c0_i32 = arith.constant 0 : i32
    %c0_i32_0 = arith.constant 0 : i32
    %c0_i32_1 = arith.constant 0 : i32
    return %c0_i32, %c0_i32_0 : i32, i32
  }
  func.func @transform_6(%arg0: i32) -> (i32, i32) {
    %c0_i32 = arith.constant 0 : i32
    %c0_i32_0 = arith.constant 0 : i32
    %c0_i32_1 = arith.constant 0 : i32
    return %c0_i32, %c0_i32_0 : i32, i32
  }
  func.func @transform_7(%arg0: i32) -> (i32, i32, i32) {
    %c0_i32 = arith.constant 0 : i32
    %c0_i32_0 = arith.constant 0 : i32
    %c0_i32_1 = arith.constant 0 : i32
    %c0_i32_2 = arith.constant 0 : i32
    return %c0_i32, %c0_i32_0, %c0_i32_1 : i32, i32, i32
  }
}

</mosaic_0001>

<llo_original>
// kernel: decoder_forward.1
$region0: #{decoder_forward.1}
  #allocation0 [shape = 'u32[]', space=smem, size = 0x4, offset = 0x4, fixed_abs, tag = 'smem constant byte address 0x4 - core index']
  #allocation1 [shape = 'u32[144,128]{1,0:T(1,128)}', space=vmem, size = 0x12000, scoped, tag = 'internal scratch']
  #allocation2 [shape = 'f32[8,128]{1,0:T(8,128)}', space=vmem, size = 0x1000, scoped, tag = 'scratch operand']
  %s0 = inlined_call_operand.vmem [shape: bf16[8,128], index: 0, kind: input, shape index: {}]
  %s1 = inlined_call_operand.vmem [shape: f32[2,1,128], index: 1, kind: input, shape index: {}]
  %s2 = inlined_call_operand.hbm [shape: bf16[2,256,512], index: 2, kind: input, shape index: {}]
  %s3 = inlined_call_operand.vmem [shape: f32[2,1,512], index: 3, kind: input, shape index: {}]
  %s4 = inlined_call_operand.hbm [shape: bf16[128,256], index: 4, kind: input, shape index: {}]
  %s5 = inlined_call_operand.vmem [shape: f32[1,256], index: 5, kind: input, shape index: {}]
  %s6 = inlined_call_operand.vmem [shape: f32[8,256], index: 6, kind: output, shape index: {0}]
  %s7 = inlined_call_operand.hbm [shape: f32[2,1,128], index: 7, kind: output, shape index: {1}]
  %8 = xla_tuple %s6, %s7
  %s9 = sld [smem:[#allocation0]]
  $region50: #{decoder_forward.1} parent=0
    _
  %s11 = ssub.s32 1, %s9
  %s12 = scalar_select 0, %s11, %s9
  $region1: #{decoder_forward.1} parent=0
    #allocation3 [shape = 'u8[524288]{0}', space=vmem, size = 0x80000, scoped, tag = 'input window, operand 2, single buffered']
    #allocation4 [shape = 's32[1]{0}', space=sflag, size = 0x4, scoped, tag = 'scoped memory for decoder_forward.1']
    #allocation5 [shape = 's32[1]{0}', space=sflag, size = 0x4, scoped, tag = 'scoped memory for decoder_forward.1']
    #allocation6 [shape = 'u8[65536]{0}', space=vmem, size = 0x10000, scoped, tag = 'input window, operand 4, single buffered']
    #allocation7 [shape = 's32[1]{0}', space=sflag, size = 0x4, scoped, tag = 'scoped memory for decoder_forward.1']
    #allocation8 [shape = 'u8[1024]{0}', space=vmem, size = 0x400, scoped, tag = 'output window, operand 1, single buffered']
    %13 = vsyncpa [#allocation4], 0
    %14 = vsyncpa [#allocation7], 0
    %15 = vsyncpa [#allocation5], 0
    // Predicated region
    $region2: #{decoder_forward.1} parent=1 // pred_check
      _
    $region3: #{decoder_forward.1} parent=1 // pred_check_branch
      %17 = sbr.rel (0) target = $region5
    $region4: #{decoder_forward.1} parent=1 // pred_region
      _
    $region5: #{decoder_forward.1} parent=1 // pred_fallthru
      _
    // Predicated region
    $region6: #{decoder_forward.1} parent=1 // pred_check
      _
    $region7: #{decoder_forward.1} parent=1 // pred_check_branch
      %19 = sbr.rel (0) target = $region9
    $region8: #{decoder_forward.1} parent=1 // pred_region
      _
    $region9: #{decoder_forward.1} parent=1 // pred_fallthru
      _
    // Predicated region
    $region10: #{decoder_forward.1} parent=1 // pred_check
      _
    $region11: #{decoder_forward.1} parent=1 // pred_check_branch
      %21 = sbr.rel (0) target = $region13
    $region12: #{decoder_forward.1} parent=1 // pred_region
      %s23 = ssub.s32 16384, 16384
      %24 = vsyncadd [#allocation4], %s23
      %s25 = sshll.u32 [#allocation3], 4
      %s26 = int_to_ptr.vmem [resolvable:$true] %s25
      %31 = dma.hbm_to_vmem [thread:$0]  %s2, 16384, %s26, [#allocation4], 256, 256, 16
    $region13: #{decoder_forward.1} parent=1 // pred_fallthru
      _
    // Predicated region
    $region14: #{decoder_forward.1} parent=1 // pred_check
      _
    $region15: #{decoder_forward.1} parent=1 // pred_check_branch
      %33 = sbr.rel (0) target = $region17
    $region16: #{decoder_forward.1} parent=1 // pred_region
      _
    $region17: #{decoder_forward.1} parent=1 // pred_fallthru
      _
    // Predicated region
    $region18: #{decoder_forward.1} parent=1 // pred_check
      _
    $region19: #{decoder_forward.1} parent=1 // pred_check_branch
      %35 = sbr.rel (0) target = $region21
    $region20: #{decoder_forward.1} parent=1 // pred_region
      %s37 = ssub.s32 2048, 2048
      %38 = vsyncadd [#allocation7], %s37
      %s39 = sshll.u32 [#allocation6], 4
      %s40 = int_to_ptr.vmem [resolvable:$true] %s39
      %45 = dma.hbm_to_vmem [thread:$0]  %s4, 2048, %s40, [#allocation7], 128, 128, 8
    $region21: #{decoder_forward.1} parent=1 // pred_fallthru
      _
    // Predicated region
    $region22: #{decoder_forward.1} parent=1 // pred_check
      _
    $region23: #{decoder_forward.1} parent=1 // pred_check_branch
      %47 = sbr.rel (0) target = $region25
    $region24: #{decoder_forward.1} parent=1 // pred_region
      _
    $region25: #{decoder_forward.1} parent=1 // pred_fallthru
      _
    // Predicated region
    $region26: #{decoder_forward.1} parent=1 // pred_check
      _
    $region27: #{decoder_forward.1} parent=1 // pred_check_branch
      %49 = sbr.rel (0) target = $region29
    $region28: #{decoder_forward.1} parent=1 // pred_region
      %50 = dma.done [#allocation4], 16384
    $region29: #{decoder_forward.1} parent=1 // pred_fallthru
      _
    // Predicated region
    $region30: #{decoder_forward.1} parent=1 // pred_check
      _
    $region31: #{decoder_forward.1} parent=1 // pred_check_branch
      %52 = sbr.rel (0) target = $region33
    $region32: #{decoder_forward.1} parent=1 // pred_region
      %53 = dma.done [#allocation7], 2048
    $region33: #{decoder_forward.1} parent=1 // pred_fallthru
      _
    %55 = vst [vmem:[#allocation2] sm:$0xff] 0.0
    %v56 = vld [vmem:[%s1] sm:$0x1]
    %s57 = scalar_lea.vmem %s1, 1
    %v58 = vld [vmem:[%s57] sm:$0x1]
    %v59 = vld [vmem:[%s0] sm:$0x1]
    %v60 = vpack.c.bf16 %v56, %v56
    %v61 = vld [vmem:[#allocation3] sm:$0xff]
    %v62 = vld [vmem:[#allocation3 + $0x8] sm:$0xff]
    %v63 = vld [vmem:[#allocation3 + $0x10] sm:$0xff]
    %v64 = vld [vmem:[#allocation3 + $0x18] sm:$0xff]
    %v65 = vld [vmem:[#allocation3 + $0x20] sm:$0xff]
    %v66 = vld [vmem:[#allocation3 + $0x28] sm:$0xff]
    %v67 = vld [vmem:[#allocation3 + $0x30] sm:$0xff]
    %v68 = vld [vmem:[#allocation3 + $0x38] sm:$0xff]
    %v69 = vld [vmem:[#allocation3 + $0x40] sm:$0xff]
    %v70 = vld [vmem:[#allocation3 + $0x48] sm:$0xff]
    %v71 = vld [vmem:[#allocation3 + $0x50] sm:$0xff]
    %v72 = vld [vmem:[#allocation3 + $0x58] sm:$0xff]
    %v73 = vld [vmem:[#allocation3 + $0x60] sm:$0xff]
    %v74 = vld [vmem:[#allocation3 + $0x68] sm:$0xff]
    %v75 = vld [vmem:[#allocation3 + $0x70] sm:$0xff]
    %v76 = vld [vmem:[#allocation3 + $0x78] sm:$0xff]
    %v77 = vld [vmem:[#allocation3 + $0x80] sm:$0xff]
    %v78 = vld [vmem:[#allocation3 + $0x88] sm:$0xff]
    %v79 = vld [vmem:[#allocation3 + $0x90] sm:$0xff]
    %v80 = vld [vmem:[#allocation3 + $0x98] sm:$0xff]
    %v81 = vld [vmem:[#allocation3 + $0xa0] sm:$0xff]
    %v82 = vld [vmem:[#allocation3 + $0xa8] sm:$0xff]
    %v83 = vld [vmem:[#allocation3 + $0xb0] sm:$0xff]
    %v84 = vld [vmem:[#allocation3 + $0xb8] sm:$0xff]
    %v85 = vld [vmem:[#allocation3 + $0xc0] sm:$0xff]
    %v86 = vld [vmem:[#allocation3 + $0xc8] sm:$0xff]
    %v87 = vld [vmem:[#allocation3 + $0xd0] sm:$0xff]
    %v88 = vld [vmem:[#allocation3 + $0xd8] sm:$0xff]
    %v89 = vld [vmem:[#allocation3 + $0xe0] sm:$0xff]
    %v90 = vld [vmem:[#allocation3 + $0xe8] sm:$0xff]
    %v91 = vld [vmem:[#allocation3 + $0xf0] sm:$0xff]
    %v92 = vld [vmem:[#allocation3 + $0xf8] sm:$0xff]
    %v93 = vld [vmem:[#allocation3 + $0x100] sm:$0xff]
    %v94 = vld [vmem:[#allocation3 + $0x108] sm:$0xff]
    %v95 = vld [vmem:[#allocation3 + $0x110] sm:$0xff]
    %v96 = vld [vmem:[#allocation3 + $0x118] sm:$0xff]
    %v97 = vld [vmem:[#allocation3 + $0x120] sm:$0xff]
    %v98 = vld [vmem:[#allocation3 + $0x128] sm:$0xff]
    %v99 = vld [vmem:[#allocation3 + $0x130] sm:$0xff]
    %v100 = vld [vmem:[#allocation3 + $0x138] sm:$0xff]
    %v101 = vld [vmem:[#allocation3 + $0x140] sm:$0xff]
    %v102 = vld [vmem:[#allocation3 + $0x148] sm:$0xff]
    %v103 = vld [vmem:[#allocation3 + $0x150] sm:$0xff]
    %v104 = vld [vmem:[#allocation3 + $0x158] sm:$0xff]
    %v105 = vld [vmem:[#allocation3 + $0x160] sm:$0xff]
    %v106 = vld [vmem:[#allocation3 + $0x168] sm:$0xff]
    %v107 = vld [vmem:[#allocation3 + $0x170] sm:$0xff]
    %v108 = vld [vmem:[#allocation3 + $0x178] sm:$0xff]
    %v109 = vld [vmem:[#allocation3 + $0x180] sm:$0xff]
    %v110 = vld [vmem:[#allocation3 + $0x188] sm:$0xff]
    %v111 = vld [vmem:[#allocation3 + $0x190] sm:$0xff]
    %v112 = vld [vmem:[#allocation3 + $0x198] sm:$0xff]
    %v113 = vld [vmem:[#allocation3 + $0x1a0] sm:$0xff]
    %v114 = vld [vmem:[#allocation3 + $0x1a8] sm:$0xff]
    %v115 = vld [vmem:[#allocation3 + $0x1b0] sm:$0xff]
    %v116 = vld [vmem:[#allocation3 + $0x1b8] sm:$0xff]
    %v117 = vld [vmem:[#allocation3 + $0x1c0] sm:$0xff]
    %v118 = vld [vmem:[#allocation3 + $0x1c8] sm:$0xff]
    %v119 = vld [vmem:[#allocation3 + $0x1d0] sm:$0xff]
    %v120 = vld [vmem:[#allocation3 + $0x1d8] sm:$0xff]
    %v121 = vld [vmem:[#allocation3 + $0x1e0] sm:$0xff]
    %v122 = vld [vmem:[#allocation3 + $0x1e8] sm:$0xff]
    %v123 = vld [vmem:[#allocation3 + $0x1f0] sm:$0xff]
    %v124 = vld [vmem:[#allocation3 + $0x1f8] sm:$0xff]
    %v125 = vld [vmem:[%s3] sm:$0xf]
    %v190 = vunpack.c.l.b16 %v61
    %v191 = vunpack.c.h.b16 %v61
    %v192 = vunpack.c.l.b16 %v62
    %v193 = vunpack.c.h.b16 %v62
    %v194 = vunpack.c.l.b16 %v63
    %v195 = vunpack.c.h.b16 %v63
    %v196 = vunpack.c.l.b16 %v64
    %v197 = vunpack.c.h.b16 %v64
    %v198 = vunpack.c.l.b16 %v65
    %v199 = vunpack.c.h.b16 %v65
    %v200 = vunpack.c.l.b16 %v66
    %v201 = vunpack.c.h.b16 %v66
    %v202 = vunpack.c.l.b16 %v67
    %v203 = vunpack.c.h.b16 %v67
    %v204 = vunpack.c.l.b16 %v68
    %v205 = vunpack.c.h.b16 %v68
    %v206 = vunpack.c.l.b16 %v69
    %v207 = vunpack.c.h.b16 %v69
    %v208 = vunpack.c.l.b16 %v70
    %v209 = vunpack.c.h.b16 %v70
    %v210 = vunpack.c.l.b16 %v71
    %v211 = vunpack.c.h.b16 %v71
    %v212 = vunpack.c.l.b16 %v72
    %v213 = vunpack.c.h.b16 %v72
    %v214 = vunpack.c.l.b16 %v73
    %v215 = vunpack.c.h.b16 %v73
    %v216 = vunpack.c.l.b16 %v74
    %v217 = vunpack.c.h.b16 %v74
    %v218 = vunpack.c.l.b16 %v75
    %v219 = vunpack.c.h.b16 %v75
    %v220 = vunpack.c.l.b16 %v76
    %v221 = vunpack.c.h.b16 %v76
    %v222 = vunpack.c.l.b16 %v77
    %v223 = vunpack.c.h.b16 %v77
    %v224 = vunpack.c.l.b16 %v78
    %v225 = vunpack.c.h.b16 %v78
    %v226 = vunpack.c.l.b16 %v79
    %v227 = vunpack.c.h.b16 %v79
    %v228 = vunpack.c.l.b16 %v80
    %v229 = vunpack.c.h.b16 %v80
    %v230 = vunpack.c.l.b16 %v81
    %v231 = vunpack.c.h.b16 %v81
    %v232 = vunpack.c.l.b16 %v82
    %v233 = vunpack.c.h.b16 %v82
    %v234 = vunpack.c.l.b16 %v83
    %v235 = vunpack.c.h.b16 %v83
    %v236 = vunpack.c.l.b16 %v84
    %v237 = vunpack.c.h.b16 %v84
    %v238 = vunpack.c.l.b16 %v85
    %v239 = vunpack.c.h.b16 %v85
    %v240 = vunpack.c.l.b16 %v86
    %v241 = vunpack.c.h.b16 %v86
    %v242 = vunpack.c.l.b16 %v87
    %v243 = vunpack.c.h.b16 %v87
    %v244 = vunpack.c.l.b16 %v88
    %v245 = vunpack.c.h.b16 %v88
    %v246 = vunpack.c.l.b16 %v89
    %v247 = vunpack.c.h.b16 %v89
    %v248 = vunpack.c.l.b16 %v90
    %v249 = vunpack.c.h.b16 %v90
    %v250 = vunpack.c.l.b16 %v91
    %v251 = vunpack.c.h.b16 %v91
    %v252 = vunpack.c.l.b16 %v92
    %v253 = vunpack.c.h.b16 %v92
    %v254 = vunpack.c.l.b16 %v93
    %v255 = vunpack.c.h.b16 %v93
    %v256 = vunpack.c.l.b16 %v94
    %v257 = vunpack.c.h.b16 %v94
    %v258 = vunpack.c.l.b16 %v95
    %v259 = vunpack.c.h.b16 %v95
    %v260 = vunpack.c.l.b16 %v96
    %v261 = vunpack.c.h.b16 %v96
    %v262 = vunpack.c.l.b16 %v97
    %v263 = vunpack.c.h.b16 %v97
    %v264 = vunpack.c.l.b16 %v98
    %v265 = vunpack.c.h.b16 %v98
    %v266 = vunpack.c.l.b16 %v99
    %v267 = vunpack.c.h.b16 %v99
    %v268 = vunpack.c.l.b16 %v100
    %v269 = vunpack.c.h.b16 %v100
    %v270 = vunpack.c.l.b16 %v101
    %v271 = vunpack.c.h.b16 %v101
    %v272 = vunpack.c.l.b16 %v102
    %v273 = vunpack.c.h.b16 %v102
    %v274 = vunpack.c.l.b16 %v103
    %v275 = vunpack.c.h.b16 %v103
    %v276 = vunpack.c.l.b16 %v104
    %v277 = vunpack.c.h.b16 %v104
    %v278 = vunpack.c.l.b16 %v105
    %v279 = vunpack.c.h.b16 %v105
    %v280 = vunpack.c.l.b16 %v106
    %v281 = vunpack.c.h.b16 %v106
    %v282 = vunpack.c.l.b16 %v107
    %v283 = vunpack.c.h.b16 %v107
    %v284 = vunpack.c.l.b16 %v108
    %v285 = vunpack.c.h.b16 %v108
    %v286 = vunpack.c.l.b16 %v109
    %v287 = vunpack.c.h.b16 %v109
    %v288 = vunpack.c.l.b16 %v110
    %v289 = vunpack.c.h.b16 %v110
    %v290 = vunpack.c.l.b16 %v111
    %v291 = vunpack.c.h.b16 %v111
    %v292 = vunpack.c.l.b16 %v112
    %v293 = vunpack.c.h.b16 %v112
    %v294 = vunpack.c.l.b16 %v113
    %v295 = vunpack.c.h.b16 %v113
    %v296 = vunpack.c.l.b16 %v114
    %v297 = vunpack.c.h.b16 %v114
    %v298 = vunpack.c.l.b16 %v115
    %v299 = vunpack.c.h.b16 %v115
    %v300 = vunpack.c.l.b16 %v116
    %v301 = vunpack.c.h.b16 %v116
    %v302 = vunpack.c.l.b16 %v117
    %v303 = vunpack.c.h.b16 %v117
    %v304 = vunpack.c.l.b16 %v118
    %v305 = vunpack.c.h.b16 %v118
    %v306 = vunpack.c.l.b16 %v119
    %v307 = vunpack.c.h.b16 %v119
    %v308 = vunpack.c.l.b16 %v120
    %v309 = vunpack.c.h.b16 %v120
    %v310 = vunpack.c.l.b16 %v121
    %v311 = vunpack.c.h.b16 %v121
    %v312 = vunpack.c.l.b16 %v122
    %v313 = vunpack.c.h.b16 %v122
    %v314 = vunpack.c.l.b16 %v123
    %v315 = vunpack.c.h.b16 %v123
    %v316 = vunpack.c.l.b16 %v124
    %v317 = vunpack.c.h.b16 %v124
    %v318 = vpack.c.b16 %v194, %v190
    %v319 = vpack.c.b16 %v195, %v191
    %v320 = vpack.c.b16 %v196, %v192
    %v321 = vpack.c.b16 %v197, %v193
    %v322 = vpack.c.b16 %v202, %v198
    %v323 = vpack.c.b16 %v203, %v199
    %v324 = vpack.c.b16 %v204, %v200
    %v325 = vpack.c.b16 %v205, %v201
    %v326 = vpack.c.b16 %v210, %v206
    %v327 = vpack.c.b16 %v211, %v207
    %v328 = vpack.c.b16 %v212, %v208
    %v329 = vpack.c.b16 %v213, %v209
    %v330 = vpack.c.b16 %v218, %v214
    %v331 = vpack.c.b16 %v219, %v215
    %v332 = vpack.c.b16 %v220, %v216
    %v333 = vpack.c.b16 %v221, %v217
    %v334 = vpack.c.b16 %v226, %v222
    %v335 = vpack.c.b16 %v227, %v223
    %v336 = vpack.c.b16 %v228, %v224
    %v337 = vpack.c.b16 %v229, %v225
    %v338 = vpack.c.b16 %v234, %v230
    %v339 = vpack.c.b16 %v235, %v231
    %v340 = vpack.c.b16 %v236, %v232
    %v341 = vpack.c.b16 %v237, %v233
    %v342 = vpack.c.b16 %v242, %v238
    %v343 = vpack.c.b16 %v243, %v239
    %v344 = vpack.c.b16 %v244, %v240
    %v345 = vpack.c.b16 %v245, %v241
    %v346 = vpack.c.b16 %v250, %v246
    %v347 = vpack.c.b16 %v251, %v247
    %v348 = vpack.c.b16 %v252, %v248
    %v349 = vpack.c.b16 %v253, %v249
    %v350 = vpack.c.b16 %v258, %v254
    %v351 = vpack.c.b16 %v259, %v255
    %v352 = vpack.c.b16 %v260, %v256
    %v353 = vpack.c.b16 %v261, %v257
    %v354 = vpack.c.b16 %v266, %v262
    %v355 = vpack.c.b16 %v267, %v263
    %v356 = vpack.c.b16 %v268, %v264
    %v357 = vpack.c.b16 %v269, %v265
    %v358 = vpack.c.b16 %v274, %v270
    %v359 = vpack.c.b16 %v275, %v271
    %v360 = vpack.c.b16 %v276, %v272
    %v361 = vpack.c.b16 %v277, %v273
    %v362 = vpack.c.b16 %v282, %v278
    %v363 = vpack.c.b16 %v283, %v279
    %v364 = vpack.c.b16 %v284, %v280
    %v365 = vpack.c.b16 %v285, %v281
    %v366 = vpack.c.b16 %v290, %v286
    %v367 = vpack.c.b16 %v291, %v287
    %v368 = vpack.c.b16 %v292, %v288
    %v369 = vpack.c.b16 %v293, %v289
    %v370 = vpack.c.b16 %v298, %v294
    %v371 = vpack.c.b16 %v299, %v295
    %v372 = vpack.c.b16 %v300, %v296
    %v373 = vpack.c.b16 %v301, %v297
    %v374 = vpack.c.b16 %v306, %v302
    %v375 = vpack.c.b16 %v307, %v303
    %v376 = vpack.c.b16 %v308, %v304
    %v377 = vpack.c.b16 %v309, %v305
    %v378 = vpack.c.b16 %v314, %v310
    %v379 = vpack.c.b16 %v315, %v311
    %v380 = vpack.c.b16 %v316, %v312
    %v381 = vpack.c.b16 %v317, %v313
    %v447 = vlaneseq
    %v448 = vshrl.u32 %v447, 7
    %v449 = vsub.s32 0, %v448
    %v450 = vrot.slane %v125, %v449
    %v451 = vlaneseq
    %v452 = vshrl.u32 %v451, 7
    %v453 = vsub.s32 1, %v452
    %v454 = vrot.slane %v125, %v453
    %v455 = vlaneseq
    %v456 = vshrl.u32 %v455, 7
    %v457 = vsub.s32 2, %v456
    %v458 = vrot.slane %v125, %v457
    %v459 = vlaneseq
    %v460 = vshrl.u32 %v459, 7
    %v461 = vsub.s32 3, %v460
    %v462 = vrot.slane %v125, %v461
    %467 = vmatprep.subr.bf16.mxu0 %v319
    %468 = vmatpush1.bf16.msra.mxu0 %v318
    %469 = vmatprep.subr.bf16.mxu0 %v323
    %470 = vmatpush1.bf16.msra.mxu0 %v322
    %471 = vmatprep.subr.bf16.mxu0 %v327
    %472 = vmatpush1.bf16.msra.mxu0 %v326
    %473 = vmatprep.subr.bf16.mxu0 %v331
    %474 = vmatpush1.bf16.msra.mxu0 %v330
    %475 = vmatprep.subr.bf16.mxu0 %v335
    %476 = vmatpush1.bf16.msra.mxu0 %v334
    %477 = vmatprep.subr.bf16.mxu0 %v339
    %478 = vmatpush1.bf16.msra.mxu0 %v338
    %479 = vmatprep.subr.bf16.mxu0 %v343
    %480 = vmatpush1.bf16.msra.mxu0 %v342
    %481 = vmatprep.subr.bf16.mxu0 %v347
    %482 = vmatpush1.bf16.msra.mxu0 %v346
    %483 = vmatprep.subr.bf16.mxu0 %v351
    %484 = vmatpush1.bf16.msra.mxu0 %v350
    %485 = vmatprep.subr.bf16.mxu0 %v355
    %486 = vmatpush1.bf16.msra.mxu0 %v354
    %487 = vmatprep.subr.bf16.mxu0 %v359
    %488 = vmatpush1.bf16.msra.mxu0 %v358
    %489 = vmatprep.subr.bf16.mxu0 %v363
    %490 = vmatpush1.bf16.msra.mxu0 %v362
    %491 = vmatprep.subr.bf16.mxu0 %v367
    %492 = vmatpush1.bf16.msra.mxu0 %v366
    %493 = vmatprep.subr.bf16.mxu0 %v371
    %494 = vmatpush1.bf16.msra.mxu0 %v370
    %495 = vmatprep.subr.bf16.mxu0 %v375
    %496 = vmatpush1.bf16.msra.mxu0 %v374
    %497 = vmatprep.subr.bf16.mxu0 %v379
    %498 = vmatpush1.bf16.msra.mxu0 %v378
    %499 = vmatprep.mubr.bf16.mxu0 %v60
    %500 = vmatmul.mubr.bf16.gmra.mrb[0].mxu0 %v59
    %v501 = vpop.f32.mrb[0].mxu0
    %v502 = vadd.f32 %v450, %v501
    %v503 = vpop.f32.mrb[0].mxu0
    %v504 = vadd.f32 %v454, %v503
    %v505 = vpop.f32.mrb[0].mxu0
    %v506 = vpop.f32.mrb[0].mxu0
    %507 = vdwg.mxu0
    %508 = vmatprep.subr.bf16.mxu0 %v321
    %509 = vmatpush1.bf16.msra.mxu0 %v320
    %510 = vmatprep.subr.bf16.mxu0 %v325
    %511 = vmatpush1.bf16.msra.mxu0 %v324
    %512 = vmatprep.subr.bf16.mxu0 %v329
    %513 = vmatpush1.bf16.msra.mxu0 %v328
    %514 = vmatprep.subr.bf16.mxu0 %v333
    %515 = vmatpush1.bf16.msra.mxu0 %v332
    %516 = vmatprep.subr.bf16.mxu0 %v337
    %517 = vmatpush1.bf16.msra.mxu0 %v336
    %518 = vmatprep.subr.bf16.mxu0 %v341
    %519 = vmatpush1.bf16.msra.mxu0 %v340
    %520 = vmatprep.subr.bf16.mxu0 %v345
    %521 = vmatpush1.bf16.msra.mxu0 %v344
    %522 = vmatprep.subr.bf16.mxu0 %v349
    %523 = vmatpush1.bf16.msra.mxu0 %v348
    %524 = vmatprep.subr.bf16.mxu0 %v353
    %525 = vmatpush1.bf16.msra.mxu0 %v352
    %526 = vmatprep.subr.bf16.mxu0 %v357
    %527 = vmatpush1.bf16.msra.mxu0 %v356
    %528 = vmatprep.subr.bf16.mxu0 %v361
    %529 = vmatpush1.bf16.msra.mxu0 %v360
    %530 = vmatprep.subr.bf16.mxu0 %v365
    %531 = vmatpush1.bf16.msra.mxu0 %v364
    %532 = vmatprep.subr.bf16.mxu0 %v369
    %533 = vmatpush1.bf16.msra.mxu0 %v368
    %534 = vmatprep.subr.bf16.mxu0 %v373
    %535 = vmatpush1.bf16.msra.mxu0 %v372
    %536 = vmatprep.subr.bf16.mxu0 %v377
    %537 = vmatpush1.bf16.msra.mxu0 %v376
    %538 = vmatprep.subr.bf16.mxu0 %v381
    %539 = vmatpush1.bf16.msra.mxu0 %v380
    %540 = vmatprep.mubr.bf16.mxu0 %v60
    %541 = vmatmul.mubr.bf16.gmra.mrb[0].mxu0 %v59
    %v542 = vpop.f32.mrb[0].mxu0
    %v543 = vadd.f32 %v458, %v542
    %v544 = vpop.f32.mrb[0].mxu0
    %v545 = vadd.f32 %v462, %v544
    %v546 = vpop.f32.mrb[0].mxu0
    %v547 = vpop.f32.mrb[0].mxu0
    %548 = vdwg.mxu0
    %v549 = vxor.u32 %v502, 2147483648
    %v550 = vmul.f32 %v549, 1.442695
    %v551 = vpow.pop %v550
    %v552 = vadd.f32 %v551, 1.0
    %v553 = vrcp.pop %v552
    %v554 = vmul.f32 1.0, %v553
    %v555 = vxor.u32 %v504, 2147483648
    %v556 = vmul.f32 %v555, 1.442695
    %v557 = vpow.pop %v556
    %v558 = vadd.f32 %v557, 1.0
    %v559 = vrcp.pop %v558
    %v560 = vmul.f32 1.0, %v559
    %v561 = vmul.f32 %v554, %v545
    %v562 = vadd.f32 %v543, %v561
    %v563 = vtanh.pop %v562
    %v564 = vsub.f32 1.0, %v560
    %v565 = vmul.f32 %v564, %v563
    %v566 = vmul.f32 %v560, %v56
    %v567 = vadd.f32 %v565, %v566
    %v568 = vpack.c.bf16 %v567, %v567
    %v569 = vpack.c.bf16 %v58, %v58
    %s570 = scalar_lea.vmem [#allocation3], 512
    %v571 = vld [vmem:[%s570] sm:$0xff]
    %v572 = vld [vmem:[%s570 + $0x8] sm:$0xff]
    %v573 = vld [vmem:[%s570 + $0x10] sm:$0xff]
    %v574 = vld [vmem:[%s570 + $0x18] sm:$0xff]
    %v575 = vld [vmem:[%s570 + $0x20] sm:$0xff]
    %v576 = vld [vmem:[%s570 + $0x28] sm:$0xff]
    %v577 = vld [vmem:[%s570 + $0x30] sm:$0xff]
    %v578 = vld [vmem:[%s570 + $0x38] sm:$0xff]
    %v579 = vld [vmem:[%s570 + $0x40] sm:$0xff]
    %v580 = vld [vmem:[%s570 + $0x48] sm:$0xff]
    %v581 = vld [vmem:[%s570 + $0x50] sm:$0xff]
    %v582 = vld [vmem:[%s570 + $0x58] sm:$0xff]
    %v583 = vld [vmem:[%s570 + $0x60] sm:$0xff]
    %v584 = vld [vmem:[%s570 + $0x68] sm:$0xff]
    %v585 = vld [vmem:[%s570 + $0x70] sm:$0xff]
    %v586 = vld [vmem:[%s570 + $0x78] sm:$0xff]
    %v587 = vld [vmem:[%s570 + $0x80] sm:$0xff]
    %v588 = vld [vmem:[%s570 + $0x88] sm:$0xff]
    %v589 = vld [vmem:[%s570 + $0x90] sm:$0xff]
    %v590 = vld [vmem:[%s570 + $0x98] sm:$0xff]
    %v591 = vld [vmem:[%s570 + $0xa0] sm:$0xff]
    %v592 = vld [vmem:[%s570 + $0xa8] sm:$0xff]
    %v593 = vld [vmem:[%s570 + $0xb0] sm:$0xff]
    %v594 = vld [vmem:[%s570 + $0xb8] sm:$0xff]
    %v595 = vld [vmem:[%s570 + $0xc0] sm:$0xff]
    %v596 = vld [vmem:[%s570 + $0xc8] sm:$0xff]
    %v597 = vld [vmem:[%s570 + $0xd0] sm:$0xff]
    %v598 = vld [vmem:[%s570 + $0xd8] sm:$0xff]
    %v599 = vld [vmem:[%s570 + $0xe0] sm:$0xff]
    %v600 = vld [vmem:[%s570 + $0xe8] sm:$0xff]
    %v601 = vld [vmem:[%s570 + $0xf0] sm:$0xff]
    %v602 = vld [vmem:[%s570 + $0xf8] sm:$0xff]
    %v603 = vld [vmem:[%s570 + $0x100] sm:$0xff]
    %v604 = vld [vmem:[%s570 + $0x108] sm:$0xff]
    %v605 = vld [vmem:[%s570 + $0x110] sm:$0xff]
    %v606 = vld [vmem:[%s570 + $0x118] sm:$0xff]
    %v607 = vld [vmem:[%s570 + $0x120] sm:$0xff]
    %v608 = vld [vmem:[%s570 + $0x128] sm:$0xff]
    %v609 = vld [vmem:[%s570 + $0x130] sm:$0xff]
    %v610 = vld [vmem:[%s570 + $0x138] sm:$0xff]
    %v611 = vld [vmem:[%s570 + $0x140] sm:$0xff]
    %v612 = vld [vmem:[%s570 + $0x148] sm:$0xff]
    %v613 = vld [vmem:[%s570 + $0x150] sm:$0xff]
    %v614 = vld [vmem:[%s570 + $0x158] sm:$0xff]
    %v615 = vld [vmem:[%s570 + $0x160] sm:$0xff]
    %v616 = vld [vmem:[%s570 + $0x168] sm:$0xff]
    %v617 = vld [vmem:[%s570 + $0x170] sm:$0xff]
    %v618 = vld [vmem:[%s570 + $0x178] sm:$0xff]
    %v619 = vld [vmem:[%s570 + $0x180] sm:$0xff]
    %v620 = vld [vmem:[%s570 + $0x188] sm:$0xff]
    %v621 = vld [vmem:[%s570 + $0x190] sm:$0xff]
    %v622 = vld [vmem:[%s570 + $0x198] sm:$0xff]
    %v623 = vld [vmem:[%s570 + $0x1a0] sm:$0xff]
    %v624 = vld [vmem:[%s570 + $0x1a8] sm:$0xff]
    %v625 = vld [vmem:[%s570 + $0x1b0] sm:$0xff]
    %v626 = vld [vmem:[%s570 + $0x1b8] sm:$0xff]
    %v627 = vld [vmem:[%s570 + $0x1c0] sm:$0xff]
    %v628 = vld [vmem:[%s570 + $0x1c8] sm:$0xff]
    %v629 = vld [vmem:[%s570 + $0x1d0] sm:$0xff]
    %v630 = vld [vmem:[%s570 + $0x1d8] sm:$0xff]
    %v631 = vld [vmem:[%s570 + $0x1e0] sm:$0xff]
    %v632 = vld [vmem:[%s570 + $0x1e8] sm:$0xff]
    %v633 = vld [vmem:[%s570 + $0x1f0] sm:$0xff]
    %v634 = vld [vmem:[%s570 + $0x1f8] sm:$0xff]
    %s635 = scalar_lea.vmem %s3, 4
    %v636 = vld [vmem:[%s635] sm:$0xf]
    %v701 = vunpack.c.l.b16 %v571
    %v702 = vunpack.c.h.b16 %v571
    %v703 = vunpack.c.l.b16 %v572
    %v704 = vunpack.c.h.b16 %v572
    %v705 = vunpack.c.l.b16 %v573
    %v706 = vunpack.c.h.b16 %v573
    %v707 = vunpack.c.l.b16 %v574
    %v708 = vunpack.c.h.b16 %v574
    %v709 = vunpack.c.l.b16 %v575
    %v710 = vunpack.c.h.b16 %v575
    %v711 = vunpack.c.l.b16 %v576
    %v712 = vunpack.c.h.b16 %v576
    %v713 = vunpack.c.l.b16 %v577
    %v714 = vunpack.c.h.b16 %v577
    %v715 = vunpack.c.l.b16 %v578
    %v716 = vunpack.c.h.b16 %v578
    %v717 = vunpack.c.l.b16 %v579
    %v718 = vunpack.c.h.b16 %v579
    %v719 = vunpack.c.l.b16 %v580
    %v720 = vunpack.c.h.b16 %v580
    %v721 = vunpack.c.l.b16 %v581
    %v722 = vunpack.c.h.b16 %v581
    %v723 = vunpack.c.l.b16 %v582
    %v724 = vunpack.c.h.b16 %v582
    %v725 = vunpack.c.l.b16 %v583
    %v726 = vunpack.c.h.b16 %v583
    %v727 = vunpack.c.l.b16 %v584
    %v728 = vunpack.c.h.b16 %v584
    %v729 = vunpack.c.l.b16 %v585
    %v730 = vunpack.c.h.b16 %v585
    %v731 = vunpack.c.l.b16 %v586
    %v732 = vunpack.c.h.b16 %v586
    %v733 = vunpack.c.l.b16 %v587
    %v734 = vunpack.c.h.b16 %v587
    %v735 = vunpack.c.l.b16 %v588
    %v736 = vunpack.c.h.b16 %v588
    %v737 = vunpack.c.l.b16 %v589
    %v738 = vunpack.c.h.b16 %v589
    %v739 = vunpack.c.l.b16 %v590
    %v740 = vunpack.c.h.b16 %v590
    %v741 = vunpack.c.l.b16 %v591
    %v742 = vunpack.c.h.b16 %v591
    %v743 = vunpack.c.l.b16 %v592
    %v744 = vunpack.c.h.b16 %v592
    %v745 = vunpack.c.l.b16 %v593
    %v746 = vunpack.c.h.b16 %v593
    %v747 = vunpack.c.l.b16 %v594
    %v748 = vunpack.c.h.b16 %v594
    %v749 = vunpack.c.l.b16 %v595
    %v750 = vunpack.c.h.b16 %v595
    %v751 = vunpack.c.l.b16 %v596
    %v752 = vunpack.c.h.b16 %v596
    %v753 = vunpack.c.l.b16 %v597
    %v754 = vunpack.c.h.b16 %v597
    %v755 = vunpack.c.l.b16 %v598
    %v756 = vunpack.c.h.b16 %v598
    %v757 = vunpack.c.l.b16 %v599
    %v758 = vunpack.c.h.b16 %v599
    %v759 = vunpack.c.l.b16 %v600
    %v760 = vunpack.c.h.b16 %v600
    %v761 = vunpack.c.l.b16 %v601
    %v762 = vunpack.c.h.b16 %v601
    %v763 = vunpack.c.l.b16 %v602
    %v764 = vunpack.c.h.b16 %v602
    %v765 = vunpack.c.l.b16 %v603
    %v766 = vunpack.c.h.b16 %v603
    %v767 = vunpack.c.l.b16 %v604
    %v768 = vunpack.c.h.b16 %v604
    %v769 = vunpack.c.l.b16 %v605
    %v770 = vunpack.c.h.b16 %v605
    %v771 = vunpack.c.l.b16 %v606
    %v772 = vunpack.c.h.b16 %v606
    %v773 = vunpack.c.l.b16 %v607
    %v774 = vunpack.c.h.b16 %v607
    %v775 = vunpack.c.l.b16 %v608
    %v776 = vunpack.c.h.b16 %v608
    %v777 = vunpack.c.l.b16 %v609
    %v778 = vunpack.c.h.b16 %v609
    %v779 = vunpack.c.l.b16 %v610
    %v780 = vunpack.c.h.b16 %v610
    %v781 = vunpack.c.l.b16 %v611
    %v782 = vunpack.c.h.b16 %v611
    %v783 = vunpack.c.l.b16 %v612
    %v784 = vunpack.c.h.b16 %v612
    %v785 = vunpack.c.l.b16 %v613
    %v786 = vunpack.c.h.b16 %v613
    %v787 = vunpack.c.l.b16 %v614
    %v788 = vunpack.c.h.b16 %v614
    %v789 = vunpack.c.l.b16 %v615
    %v790 = vunpack.c.h.b16 %v615
    %v791 = vunpack.c.l.b16 %v616
    %v792 = vunpack.c.h.b16 %v616
    %v793 = vunpack.c.l.b16 %v617
    %v794 = vunpack.c.h.b16 %v617
    %v795 = vunpack.c.l.b16 %v618
    %v796 = vunpack.c.h.b16 %v618
    %v797 = vunpack.c.l.b16 %v619
    %v798 = vunpack.c.h.b16 %v619
    %v799 = vunpack.c.l.b16 %v620
    %v800 = vunpack.c.h.b16 %v620
    %v801 = vunpack.c.l.b16 %v621
    %v802 = vunpack.c.h.b16 %v621
    %v803 = vunpack.c.l.b16 %v622
    %v804 = vunpack.c.h.b16 %v622
    %v805 = vunpack.c.l.b16 %v623
    %v806 = vunpack.c.h.b16 %v623
    %v807 = vunpack.c.l.b16 %v624
    %v808 = vunpack.c.h.b16 %v624
    %v809 = vunpack.c.l.b16 %v625
    %v810 = vunpack.c.h.b16 %v625
    %v811 = vunpack.c.l.b16 %v626
    %v812 = vunpack.c.h.b16 %v626
    %v813 = vunpack.c.l.b16 %v627
    %v814 = vunpack.c.h.b16 %v627
    %v815 = vunpack.c.l.b16 %v628
    %v816 = vunpack.c.h.b16 %v628
    %v817 = vunpack.c.l.b16 %v629
    %v818 = vunpack.c.h.b16 %v629
    %v819 = vunpack.c.l.b16 %v630
    %v820 = vunpack.c.h.b16 %v630
    %v821 = vunpack.c.l.b16 %v631
    %v822 = vunpack.c.h.b16 %v631
    %v823 = vunpack.c.l.b16 %v632
    %v824 = vunpack.c.h.b16 %v632
    %v825 = vunpack.c.l.b16 %v633
    %v826 = vunpack.c.h.b16 %v633
    %v827 = vunpack.c.l.b16 %v634
    %v828 = vunpack.c.h.b16 %v634
    %v829 = vpack.c.b16 %v705, %v701
    %v830 = vpack.c.b16 %v706, %v702
    %v831 = vpack.c.b16 %v707, %v703
    %v832 = vpack.c.b16 %v708, %v704
    %v833 = vpack.c.b16 %v713, %v709
    %v834 = vpack.c.b16 %v714, %v710
    %v835 = vpack.c.b16 %v715, %v711
    %v836 = vpack.c.b16 %v716, %v712
    %v837 = vpack.c.b16 %v721, %v717
    %v838 = vpack.c.b16 %v722, %v718
    %v839 = vpack.c.b16 %v723, %v719
    %v840 = vpack.c.b16 %v724, %v720
    %v841 = vpack.c.b16 %v729, %v725
    %v842 = vpack.c.b16 %v730, %v726
    %v843 = vpack.c.b16 %v731, %v727
    %v844 = vpack.c.b16 %v732, %v728
    %v845 = vpack.c.b16 %v737, %v733
    %v846 = vpack.c.b16 %v738, %v734
    %v847 = vpack.c.b16 %v739, %v735
    %v848 = vpack.c.b16 %v740, %v736
    %v849 = vpack.c.b16 %v745, %v741
    %v850 = vpack.c.b16 %v746, %v742
    %v851 = vpack.c.b16 %v747, %v743
    %v852 = vpack.c.b16 %v748, %v744
    %v853 = vpack.c.b16 %v753, %v749
    %v854 = vpack.c.b16 %v754, %v750
    %v855 = vpack.c.b16 %v755, %v751
    %v856 = vpack.c.b16 %v756, %v752
    %v857 = vpack.c.b16 %v761, %v757
    %v858 = vpack.c.b16 %v762, %v758
    %v859 = vpack.c.b16 %v763, %v759
    %v860 = vpack.c.b16 %v764, %v760
    %v861 = vpack.c.b16 %v769, %v765
    %v862 = vpack.c.b16 %v770, %v766
    %v863 = vpack.c.b16 %v771, %v767
    %v864 = vpack.c.b16 %v772, %v768
    %v865 = vpack.c.b16 %v777, %v773
    %v866 = vpack.c.b16 %v778, %v774
    %v867 = vpack.c.b16 %v779, %v775
    %v868 = vpack.c.b16 %v780, %v776
    %v869 = vpack.c.b16 %v785, %v781
    %v870 = vpack.c.b16 %v786, %v782
    %v871 = vpack.c.b16 %v787, %v783
    %v872 = vpack.c.b16 %v788, %v784
    %v873 = vpack.c.b16 %v793, %v789
    %v874 = vpack.c.b16 %v794, %v790
    %v875 = vpack.c.b16 %v795, %v791
    %v876 = vpack.c.b16 %v796, %v792
    %v877 = vpack.c.b16 %v801, %v797
    %v878 = vpack.c.b16 %v802, %v798
    %v879 = vpack.c.b16 %v803, %v799
    %v880 = vpack.c.b16 %v804, %v800
    %v881 = vpack.c.b16 %v809, %v805
    %v882 = vpack.c.b16 %v810, %v806
    %v883 = vpack.c.b16 %v811, %v807
    %v884 = vpack.c.b16 %v812, %v808
    %v885 = vpack.c.b16 %v817, %v813
    %v886 = vpack.c.b16 %v818, %v814
    %v887 = vpack.c.b16 %v819, %v815
    %v888 = vpack.c.b16 %v820, %v816
    %v889 = vpack.c.b16 %v825, %v821
    %v890 = vpack.c.b16 %v826, %v822
    %v891 = vpack.c.b16 %v827, %v823
    %v892 = vpack.c.b16 %v828, %v824
    %v958 = vlaneseq
    %v959 = vshrl.u32 %v958, 7
    %v960 = vsub.s32 0, %v959
    %v961 = vrot.slane %v636, %v960
    %v962 = vlaneseq
    %v963 = vshrl.u32 %v962, 7
    %v964 = vsub.s32 1, %v963
    %v965 = vrot.slane %v636, %v964
    %v966 = vlaneseq
    %v967 = vshrl.u32 %v966, 7
    %v968 = vsub.s32 2, %v967
    %v969 = vrot.slane %v636, %v968
    %v970 = vlaneseq
    %v971 = vshrl.u32 %v970, 7
    %v972 = vsub.s32 3, %v971
    %v973 = vrot.slane %v636, %v972
    %978 = vmatprep.subr.bf16.mxu0 %v830
    %979 = vmatpush1.bf16.msra.mxu0 %v829
    %980 = vmatprep.subr.bf16.mxu0 %v834
    %981 = vmatpush1.bf16.msra.mxu0 %v833
    %982 = vmatprep.subr.bf16.mxu0 %v838
    %983 = vmatpush1.bf16.msra.mxu0 %v837
    %984 = vmatprep.subr.bf16.mxu0 %v842
    %985 = vmatpush1.bf16.msra.mxu0 %v841
    %986 = vmatprep.subr.bf16.mxu0 %v846
    %987 = vmatpush1.bf16.msra.mxu0 %v845
    %988 = vmatprep.subr.bf16.mxu0 %v850
    %989 = vmatpush1.bf16.msra.mxu0 %v849
    %990 = vmatprep.subr.bf16.mxu0 %v854
    %991 = vmatpush1.bf16.msra.mxu0 %v853
    %992 = vmatprep.subr.bf16.mxu0 %v858
    %993 = vmatpush1.bf16.msra.mxu0 %v857
    %994 = vmatprep.subr.bf16.mxu0 %v862
    %995 = vmatpush1.bf16.msra.mxu0 %v861
    %996 = vmatprep.subr.bf16.mxu0 %v866
    %997 = vmatpush1.bf16.msra.mxu0 %v865
    %998 = vmatprep.subr.bf16.mxu0 %v870
    %999 = vmatpush1.bf16.msra.mxu0 %v869
    %1000 = vmatprep.subr.bf16.mxu0 %v874
    %1001 = vmatpush1.bf16.msra.mxu0 %v873
    %1002 = vmatprep.subr.bf16.mxu0 %v878
    %1003 = vmatpush1.bf16.msra.mxu0 %v877
    %1004 = vmatprep.subr.bf16.mxu0 %v882
    %1005 = vmatpush1.bf16.msra.mxu0 %v881
    %1006 = vmatprep.subr.bf16.mxu0 %v886
    %1007 = vmatpush1.bf16.msra.mxu0 %v885
    %1008 = vmatprep.subr.bf16.mxu0 %v890
    %1009 = vmatpush1.bf16.msra.mxu0 %v889
    %1010 = vmatprep.mubr.bf16.mxu0 %v569
    %1011 = vmatmul.mubr.bf16.gmra.mrb[0].mxu0 %v568
    %v1012 = vpop.f32.mrb[0].mxu0
    %v1013 = vadd.f32 %v961, %v1012
    %v1014 = vpop.f32.mrb[0].mxu0
    %v1015 = vadd.f32 %v965, %v1014
    %v1016 = vpop.f32.mrb[0].mxu0
    %v1017 = vpop.f32.mrb[0].mxu0
    %1018 = vdwg.mxu0
    %1019 = vmatprep.subr.bf16.mxu0 %v832
    %1020 = vmatpush1.bf16.msra.mxu0 %v831
    %1021 = vmatprep.subr.bf16.mxu0 %v836
    %1022 = vmatpush1.bf16.msra.mxu0 %v835
    %1023 = vmatprep.subr.bf16.mxu0 %v840
    %1024 = vmatpush1.bf16.msra.mxu0 %v839
    %1025 = vmatprep.subr.bf16.mxu0 %v844
    %1026 = vmatpush1.bf16.msra.mxu0 %v843
    %1027 = vmatprep.subr.bf16.mxu0 %v848
    %1028 = vmatpush1.bf16.msra.mxu0 %v847
    %1029 = vmatprep.subr.bf16.mxu0 %v852
    %1030 = vmatpush1.bf16.msra.mxu0 %v851
    %1031 = vmatprep.subr.bf16.mxu0 %v856
    %1032 = vmatpush1.bf16.msra.mxu0 %v855
    %1033 = vmatprep.subr.bf16.mxu0 %v860
    %1034 = vmatpush1.bf16.msra.mxu0 %v859
    %1035 = vmatprep.subr.bf16.mxu0 %v864
    %1036 = vmatpush1.bf16.msra.mxu0 %v863
    %1037 = vmatprep.subr.bf16.mxu0 %v868
    %1038 = vmatpush1.bf16.msra.mxu0 %v867
    %1039 = vmatprep.subr.bf16.mxu0 %v872
    %1040 = vmatpush1.bf16.msra.mxu0 %v871
    %1041 = vmatprep.subr.bf16.mxu0 %v876
    %1042 = vmatpush1.bf16.msra.mxu0 %v875
    %1043 = vmatprep.subr.bf16.mxu0 %v880
    %1044 = vmatpush1.bf16.msra.mxu0 %v879
    %1045 = vmatprep.subr.bf16.mxu0 %v884
    %1046 = vmatpush1.bf16.msra.mxu0 %v883
    %1047 = vmatprep.subr.bf16.mxu0 %v888
    %1048 = vmatpush1.bf16.msra.mxu0 %v887
    %1049 = vmatprep.subr.bf16.mxu0 %v892
    %1050 = vmatpush1.bf16.msra.mxu0 %v891
    %1051 = vmatprep.mubr.bf16.mxu0 %v569
    %1052 = vmatmul.mubr.bf16.gmra.mrb[0].mxu0 %v568
    %v1053 = vpop.f32.mrb[0].mxu0
    %v1054 = vadd.f32 %v969, %v1053
    %v1055 = vpop.f32.mrb[0].mxu0
    %v1056 = vadd.f32 %v973, %v1055
    %v1057 = vpop.f32.mrb[0].mxu0
    %v1058 = vpop.f32.mrb[0].mxu0
    %1059 = vdwg.mxu0
    %v1060 = vxor.u32 %v1013, 2147483648
    %v1061 = vmul.f32 %v1060, 1.442695
    %v1062 = vpow.pop %v1061
    %v1063 = vadd.f32 %v1062, 1.0
    %v1064 = vrcp.pop %v1063
    %v1065 = vmul.f32 1.0, %v1064
    %v1066 = vxor.u32 %v1015, 2147483648
    %v1067 = vmul.f32 %v1066, 1.442695
    %v1068 = vpow.pop %v1067
    %v1069 = vadd.f32 %v1068, 1.0
    %v1070 = vrcp.pop %v1069
    %v1071 = vmul.f32 1.0, %v1070
    %v1072 = vmul.f32 %v1065, %v1056
    %v1073 = vadd.f32 %v1054, %v1072
    %v1074 = vtanh.pop %v1073
    %v1075 = vsub.f32 1.0, %v1071
    %v1076 = vmul.f32 %v1075, %v1074
    %v1077 = vmul.f32 %v1071, %v58
    %v1078 = vadd.f32 %v1076, %v1077
    %1079 = vst [vmem:[#allocation2] sm:$0x1] %v1078
    %v1080 = vld [vmem:[#allocation2] sm:$0xff]
    %v1081 = vpack.c.bf16 %v1080, %v1080
    %v1082 = vld [vmem:[#allocation6] sm:$0xff]
    %v1083 = vld [vmem:[#allocation6 + $0x8] sm:$0xff]
    %v1084 = vld [vmem:[#allocation6 + $0x10] sm:$0xff]
    %v1085 = vld [vmem:[#allocation6 + $0x18] sm:$0xff]
    %v1086 = vld [vmem:[#allocation6 + $0x20] sm:$0xff]
    %v1087 = vld [vmem:[#allocation6 + $0x28] sm:$0xff]
    %v1088 = vld [vmem:[#allocation6 + $0x30] sm:$0xff]
    %v1089 = vld [vmem:[#allocation6 + $0x38] sm:$0xff]
    %v1090 = vld [vmem:[#allocation6 + $0x40] sm:$0xff]
    %v1091 = vld [vmem:[#allocation6 + $0x48] sm:$0xff]
    %v1092 = vld [vmem:[#allocation6 + $0x50] sm:$0xff]
    %v1093 = vld [vmem:[#allocation6 + $0x58] sm:$0xff]
    %v1094 = vld [vmem:[#allocation6 + $0x60] sm:$0xff]
    %v1095 = vld [vmem:[#allocation6 + $0x68] sm:$0xff]
    %v1096 = vld [vmem:[#allocation6 + $0x70] sm:$0xff]
    %v1097 = vld [vmem:[#allocation6 + $0x78] sm:$0xff]
    %v1098 = vld [vmem:[%s5] sm:$0x3]
    %v1100 = vlaneseq
    %v1101 = vshrl.u32 %v1100, 7
    %v1102 = vsub.s32 0, %v1101
    %v1103 = vrot.slane %v1098, %v1102
    %v1104 = vlaneseq
    %v1105 = vshrl.u32 %v1104, 7
    %v1106 = vsub.s32 1, %v1105
    %v1107 = vrot.slane %v1098, %v1106
    %v1126 = vunpack.c.l.b16 %v1082
    %v1127 = vunpack.c.h.b16 %v1082
    %v1128 = vunpack.c.l.b16 %v1083
    %v1129 = vunpack.c.h.b16 %v1083
    %v1130 = vunpack.c.l.b16 %v1084
    %v1131 = vunpack.c.h.b16 %v1084
    %v1132 = vunpack.c.l.b16 %v1085
    %v1133 = vunpack.c.h.b16 %v1085
    %v1134 = vunpack.c.l.b16 %v1086
    %v1135 = vunpack.c.h.b16 %v1086
    %v1136 = vunpack.c.l.b16 %v1087
    %v1137 = vunpack.c.h.b16 %v1087
    %v1138 = vunpack.c.l.b16 %v1088
    %v1139 = vunpack.c.h.b16 %v1088
    %v1140 = vunpack.c.l.b16 %v1089
    %v1141 = vunpack.c.h.b16 %v1089
    %v1142 = vunpack.c.l.b16 %v1090
    %v1143 = vunpack.c.h.b16 %v1090
    %v1144 = vunpack.c.l.b16 %v1091
    %v1145 = vunpack.c.h.b16 %v1091
    %v1146 = vunpack.c.l.b16 %v1092
    %v1147 = vunpack.c.h.b16 %v1092
    %v1148 = vunpack.c.l.b16 %v1093
    %v1149 = vunpack.c.h.b16 %v1093
    %v1150 = vunpack.c.l.b16 %v1094
    %v1151 = vunpack.c.h.b16 %v1094
    %v1152 = vunpack.c.l.b16 %v1095
    %v1153 = vunpack.c.h.b16 %v1095
    %v1154 = vunpack.c.l.b16 %v1096
    %v1155 = vunpack.c.h.b16 %v1096
    %v1156 = vunpack.c.l.b16 %v1097
    %v1157 = vunpack.c.h.b16 %v1097
    %v1158 = vpack.c.b16 %v1128, %v1126
    %v1159 = vpack.c.b16 %v1129, %v1127
    %v1160 = vpack.c.b16 %v1132, %v1130
    %v1161 = vpack.c.b16 %v1133, %v1131
    %v1162 = vpack.c.b16 %v1136, %v1134
    %v1163 = vpack.c.b16 %v1137, %v1135
    %v1164 = vpack.c.b16 %v1140, %v1138
    %v1165 = vpack.c.b16 %v1141, %v1139
    %v1166 = vpack.c.b16 %v1144, %v1142
    %v1167 = vpack.c.b16 %v1145, %v1143
    %v1168 = vpack.c.b16 %v1148, %v1146
    %v1169 = vpack.c.b16 %v1149, %v1147
    %v1170 = vpack.c.b16 %v1152, %v1150
    %v1171 = vpack.c.b16 %v1153, %v1151
    %v1172 = vpack.c.b16 %v1156, %v1154
    %v1173 = vpack.c.b16 %v1157, %v1155
    %1190 = vmatprep.subr.bf16.mxu0 %v1159
    %1191 = vmatpush1.bf16.msra.mxu0 %v1158
    %1192 = vmatprep.subr.bf16.mxu0 %v1161
    %1193 = vmatpush1.bf16.msra.mxu0 %v1160
    %1194 = vmatprep.subr.bf16.mxu0 %v1163
    %1195 = vmatpush1.bf16.msra.mxu0 %v1162
    %1196 = vmatprep.subr.bf16.mxu0 %v1165
    %1197 = vmatpush1.bf16.msra.mxu0 %v1164
    %1198 = vmatprep.subr.bf16.mxu0 %v1167
    %1199 = vmatpush1.bf16.msra.mxu0 %v1166
    %1200 = vmatprep.subr.bf16.mxu0 %v1169
    %1201 = vmatpush1.bf16.msra.mxu0 %v1168
    %1202 = vmatprep.subr.bf16.mxu0 %v1171
    %1203 = vmatpush1.bf16.msra.mxu0 %v1170
    %1204 = vmatprep.subr.bf16.mxu0 %v1173
    %1205 = vmatpush1.bf16.msra.mxu0 %v1172
    %1206 = vmatprep.subr.bf16.mxu0 0
    %1207 = vmatpush1.bf16.msra.mxu0 0
    %1208 = vmatprep.subr.bf16.mxu0 0
    %1209 = vmatpush1.bf16.msra.mxu0 0
    %1210 = vmatprep.subr.bf16.mxu0 0
    %1211 = vmatpush1.bf16.msra.mxu0 0
    %1212 = vmatprep.subr.bf16.mxu0 0
    %1213 = vmatpush1.bf16.msra.mxu0 0
    %1214 = vmatprep.subr.bf16.mxu0 0
    %1215 = vmatpush1.bf16.msra.mxu0 0
    %1216 = vmatprep.subr.bf16.mxu0 0
    %1217 = vmatpush1.bf16.msra.mxu0 0
    %1218 = vmatprep.subr.bf16.mxu0 0
    %1219 = vmatpush1.bf16.msra.mxu0 0
    %1220 = vmatprep.subr.bf16.mxu0 0
    %1221 = vmatpush1.bf16.msra.mxu0 0
    %1222 = vmatprep.mubr.bf16.mxu0 0
    %1223 = vmatmul.mubr.bf16.gmra.mrb[0].mxu0 %v1081
    %v1224 = vpop.f32.mrb[0].mxu0
    %v1225 = vadd.f32 %v1103, %v1224
    %v1226 = vpop.f32.mrb[0].mxu0
    %v1227 = vadd.f32 %v1107, %v1226
    %v1228 = vpop.f32.mrb[0].mxu0
    %v1229 = vpop.f32.mrb[0].mxu0
    %1230 = vdwg.mxu0
    %v1231 = vmax.f32 %v1225, %v1227
    %1232 = vmax.xlane.f32.xlu0 %v1231
    %v1233 = vpop.xlane.xlu0 %1232
    %v1234 = vsub.f32 %v1225, %v1233
    %v1235 = vsub.f32 %v1227, %v1233
    %v1236 = vmul.f32 %v1234, 1.442695
    %v1237 = vpow.pop %v1236
    %v1238 = vmul.f32 %v1235, 1.442695
    %v1239 = vpow.pop %v1238
    %v1240 = vadd.f32 %v1237, %v1239
    %1241 = vadd.xlane.f32.xlu0 %v1240
    %v1242 = vpop.xlane.xlu0 %1241
    %v1243 = vlog2.pop %v1242
    %v1244 = vmul.f32 %v1243, 0.6931472
    %v1245 = vsub.f32 %v1234, %v1244
    %v1246 = vsub.f32 %v1235, %v1244
    %1247 = vst [vmem:[%s6] sm:$0xff] %v1245
    %1248 = vst [vmem:[%s6 + $0x8] sm:$0xff] %v1246
    %1249 = vst [vmem:[#allocation8] sm:$0x1] %v567
    %s1250 = scalar_lea.vmem [#allocation8], 1
    %1251 = vst [vmem:[%s1250] sm:$0x1] %v1078
    // Predicated region
    $region34: #{decoder_forward.1} parent=1 // pred_check
      _
    $region35: #{decoder_forward.1} parent=1 // pred_check_branch
      %1253 = sbr.rel (0) target = $region37
    $region36: #{decoder_forward.1} parent=1 // pred_region
      _
    $region37: #{decoder_forward.1} parent=1 // pred_fallthru
      _
    // Predicated region
    $region38: #{decoder_forward.1} parent=1 // pred_check
      _
    $region39: #{decoder_forward.1} parent=1 // pred_check_branch
      %1255 = sbr.rel (0) target = $region41
    $region40: #{decoder_forward.1} parent=1 // pred_region
      %s1257 = ssub.s32 32, 32
      %1258 = vsyncadd [#allocation5], %s1257
      %s1259 = sshll.u32 [#allocation8], 4
      %s1260 = int_to_ptr.vmem [resolvable:$true] %s1259
      %1265 = dma.vmem_to_hbm [thread:$0]  %s1260, 32, %s7, [#allocation5], 16, 16, 1
    $region41: #{decoder_forward.1} parent=1 // pred_fallthru
      _
    // Predicated region
    $region42: #{decoder_forward.1} parent=1 // pred_check
      _
    $region43: #{decoder_forward.1} parent=1 // pred_check_branch
      %1267 = sbr.rel (0) target = $region45
    $region44: #{decoder_forward.1} parent=1 // pred_region
      _
    $region45: #{decoder_forward.1} parent=1 // pred_fallthru
      _
    // Predicated region
    $region46: #{decoder_forward.1} parent=1 // pred_check
      _
    $region47: #{decoder_forward.1} parent=1 // pred_check_branch
      %1269 = sbr.rel (0) target = $region49
    $region48: #{decoder_forward.1} parent=1 // pred_region
      %1270 = dma.done [#allocation5], 32
    $region49: #{decoder_forward.1} parent=1 // pred_fallthru
      _
    %1271 = vsyncpa [#allocation4], 1
    %1272 = vsyncpa [#allocation7], 1
    %1273 = vsyncpa [#allocation5], 1

</llo_original>
